<compile_context>
chip_gen: v7x
topology: tpu7x:2x2x1
jax: 0.10.0
libtpu: 0.0.40
codegen_flags: <defaults>
</compile_context>

<pallas_src>
import functools

import jax
import jax.numpy as jnp
from jax.experimental import pallas as pl
from jax.experimental.pallas import tpu as pltpu

EPS = 1e-5  # PyTorch BatchNorm2d default eps

_VMEM_BUDGET = 28 << 20  # conservative vs. v7x's 32 MiB default scoped VMEM


# ------------------------------ Pallas kernel -------------------------------

def _conv_bn_relu_kernel(x_ref, w_ref, scale_ref, shift_ref, o_ref, *,
                         kh, kw, dil_h, dil_w, th, w_out):
    # x_ref:     (1, Hp, Wp, Cin)       bf16 -- full padded image (revisited across row tiles)
    # w_ref:     (kh*kw*Cin, Cpad)      bf16 -- UNscaled conv weights (BN applied in epilogue)
    # scale_ref: (1, Cpad)              f32  -- gamma * rsqrt(var + eps)
    # shift_ref: (1, Cpad)              f32  -- beta - mean * scale
    # o_ref:     (1, 1, th*w_out, Cpad) bf16 -- output row tile
    t = pl.program_id(1)
    h0 = t * th
    if th % 8 == 0:
        h0 = pl.multiple_of(h0, 8)       # aligned row-band start (free hint)
    cin = x_ref.shape[-1]
    m = th * w_out

    # In-VMEM im2col: build the LHS once per row tile (one repack), then a
    # single large-K MXU contraction.  Tap order (ky, kx, cin) matches the
    # wrapper's weight flattening.  Dynamic offset h0 is on a major dim (cheap
    # slice); only the small static kx offsets touch the sublane (Wp) dim.
    taps = []
    for ky in range(kh):
        for kx in range(kw):
            taps.append(x_ref[0,
                              pl.ds(h0 + ky * dil_h, th),
                              pl.ds(kx * dil_w, w_out),
                              :])                         # (th, w_out, cin) bf16
    lhs = jnp.concatenate(taps, axis=-1).reshape(m, kh * kw * cin)
    acc = jnp.dot(lhs, w_ref[...], preferred_element_type=jnp.float32)  # (m, Cpad) f32

    # f32 epilogue: eval-mode BatchNorm (scale/shift) + ReLU, store bf16.
    y = jnp.maximum(acc * scale_ref[...] + shift_ref[...], 0.0)
    o_ref[0, 0, :, :] = y.astype(o_ref.dtype)


# ------------------------------- helpers -------------------------------------

def _pair(v):
    return (v, v) if isinstance(v, int) else tuple(v)


def _round_up(v, m):
    return (v + m - 1) // m * m


def _tile_vmem_bytes(m_t, k_dim, cpad):
    lane, sub = 128, 16
    out = 2 * _round_up(m_t, sub) * _round_up(cpad, lane) * 2   # double-buffered bf16 out tile
    lhs = _round_up(m_t, sub) * _round_up(k_dim, lane) * 2      # in-kernel im2col LHS
    acc = _round_up(m_t, 8) * _round_up(cpad, lane) * 4         # f32 matmul result / epilogue
    return out + lhs + acc


def _fixed_vmem_bytes(hp, wp, cin, k_dim, cpad):
    lane, sub = 128, 16
    img = hp * _round_up(wp, sub) * _round_up(cin, lane) * 2    # bf16 padded-image block
    wgt = _round_up(k_dim, sub) * _round_up(cpad, lane) * 2     # bf16 fused weight
    vec = 2 * 8 * _round_up(cpad, lane) * 4                     # f32 scale + shift
    return 2 * (img + wgt + vec)                                # default double-buffering


def _pick_row_tile(h_out, w_out, n_batch, fixed_bytes, k_dim, cpad):
    divisors = [d for d in range(1, h_out + 1) if h_out % d == 0]
    th = 1
    for d in divisors:
        m = d * w_out
        # <= 1024 output rows per tile (amortizes grid-step overhead / MXU drain)
        # while keeping the estimated resident VMEM under budget.
        if m <= 1024 and fixed_bytes + _tile_vmem_bytes(m, k_dim, cpad) <= _VMEM_BUDGET:
            th = d
    # >= 4 total grid programs => >= 2 pipelined steps per TensorCore after
    # "parallel" megacore sharding on v7x.
    while n_batch * (h_out // th) < 4:
        smaller = [d for d in divisors if d < th]
        if not smaller:
            break
        th = smaller[-1]
    return th


# ------------------------------- wrapper --------------------------------------

def basic_conv2d_forward(x_nchw, params, *, kernel_size, stride=1, padding=0,
                         dilation=1, eps=EPS):
    kh, kw = _pair(kernel_size)
    sh, sw = _pair(stride)
    ph, pw = _pair(padding)
    dil_h, dil_w = _pair(dilation)
    if sh != 1 or sw != 1:
        # TODO(synk): stride > 1 has no Pallas path here (module default is stride=1).
        raise NotImplementedError("BasicConv2d Pallas kernel only supports stride=1")

    w_oihw = params["conv_w"]            # (O, I, kh, kw), conv has no bias
    bn = params["bn"]
    cout, cin = int(w_oihw.shape[0]), int(w_oihw.shape[1])

    # NCHW -> NHWC, bf16 activations in HBM (halves DMA + resident VMEM block).
    x = jnp.transpose(x_nchw, (0, 2, 3, 1)).astype(jnp.bfloat16)
    n, h, w, c = x.shape
    assert c == cin

    # Eval-mode BatchNorm as per-channel scale + shift, applied in the f32
    # epilogue (weights stay bf16 UNscaled to avoid amplifying quant error).
    scale = (bn["gamma"] * jax.lax.rsqrt(bn["var"] + eps)).astype(jnp.float32)
    shift = (bn["beta"] - bn["mean"] * scale).astype(jnp.float32)

    # Output-channel padding: full 128-lane padding only when cout is large
    # enough to use the lanes; for small cout a narrower (masked) store costs
    # far fewer HBM bytes than up-to-32x 128/cout inflation.
    cpad = _round_up(cout, 128) if cout >= 64 else _round_up(cout, 8)
    k_dim = kh * kw * cin

    # Weight as one fused-K matrix (kh*kw*cin, cpad); flattening order
    # (ky, kx, cin) matches the kernel's im2col concat order.
    wm = jnp.transpose(w_oihw, (2, 3, 1, 0)).reshape(k_dim, cout)
    wm = jnp.pad(wm, ((0, 0), (0, cpad - cout))).astype(jnp.bfloat16)
    scale_p = jnp.pad(scale, (0, cpad - cout)).reshape(1, cpad)
    shift_p = jnp.pad(shift, (0, cpad - cout)).reshape(1, cpad)

    # Spatial zero-pad once (bf16); conv taps are sliced from the resident image.
    xp = jnp.pad(x, ((0, 0), (ph, ph), (pw, pw), (0, 0)))
    hp, wp = h + 2 * ph, w + 2 * pw
    h_out = hp - dil_h * (kh - 1)
    w_out = wp - dil_w * (kw - 1)

    fixed = _fixed_vmem_bytes(hp, wp, cin, k_dim, cpad)
    th = _pick_row_tile(h_out, w_out, n, fixed, k_dim, cpad)
    m_t = th * w_out
    n_t = h_out // th
    total_vmem = fixed + _tile_vmem_bytes(m_t, k_dim, cpad)
    if total_vmem > _VMEM_BUDGET:
        # TODO(synk): stream row bands of the image instead of keeping it resident.
        raise ValueError(
            f"BasicConv2d Pallas kernel: estimated VMEM {total_vmem >> 20} MiB "
            f"exceeds the {_VMEM_BUDGET >> 20} MiB budget (padded image too large).")

    flops = 2 * n * h_out * w_out * k_dim * cout            # cout, NOT cpad
    bytes_accessed = (xp.size * 2 + wm.size * 2
                      + (scale_p.size + shift_p.size) * 4
                      + n * h_out * w_out * cpad * 2)

    out = pl.pallas_call(
        functools.partial(_conv_bn_relu_kernel, kh=kh, kw=kw,
                          dil_h=dil_h, dil_w=dil_w, th=th, w_out=w_out),
        out_shape=jax.ShapeDtypeStruct((n, n_t, m_t, cpad), jnp.bfloat16),
        grid=(n, n_t),
        in_specs=[
            # Whole padded image per batch index; its block index is constant
            # across the (innermost) row-tile axis, so it is not re-DMA'd
            # between consecutive tiles.
            pl.BlockSpec((1, hp, wp, cin), lambda i, t: (i, 0, 0, 0)),
            pl.BlockSpec((k_dim, cpad), lambda i, t: (0, 0)),
            pl.BlockSpec((1, cpad), lambda i, t: (0, 0)),
            pl.BlockSpec((1, cpad), lambda i, t: (0, 0)),
        ],
        out_specs=pl.BlockSpec((1, 1, m_t, cpad), lambda i, t: (i, t, 0, 0)),
        compiler_params=pltpu.CompilerParams(
            dimension_semantics=("parallel", "parallel"),
            vmem_limit_bytes=48 * 1024 * 1024),
        cost_estimate=pl.CostEstimate(flops=flops, transcendentals=0,
                                      bytes_accessed=bytes_accessed),
    )(xp, wm, scale_p, shift_p)

    out = out.reshape(n, h_out, w_out, cpad)[..., :cout]    # drop channel padding
    # TODO(synk): the slice + NHWC->NCHW transpose is one extra XLA HBM pass;
    # emitting spatial-on-lanes NCHW tiles directly would remove it.
    return jnp.transpose(out, (0, 3, 1, 2)).astype(jnp.float32)


# --------------------------- pure-JAX reference ------------------------------

def basic_conv2d_reference(x_nchw, params, *, kernel_size, stride=1, padding=0,
                           dilation=1, eps=EPS):
    kh, kw = _pair(kernel_size)
    sh, sw = _pair(stride)
    ph, pw = _pair(padding)
    dil_h, dil_w = _pair(dilation)
    w_oihw = params["conv_w"]
    bn = params["bn"]
    y = jax.lax.conv_general_dilated(
        x_nchw.astype(jnp.float32), w_oihw.astype(jnp.float32),
        window_strides=(sh, sw), padding=((ph, ph), (pw, pw)),
        rhs_dilation=(dil_h, dil_w),
        dimension_numbers=("NCHW", "OIHW", "NCHW"),
        precision=jax.lax.Precision.HIGHEST)
    scale = bn["gamma"] * jax.lax.rsqrt(bn["var"] + eps)
    shift = bn["beta"] - bn["mean"] * scale
    y = y * scale[None, :, None, None] + shift[None, :, None, None]
    return jnp.maximum(y, 0.0)


# ----------------------------------- main ------------------------------------

if __name__ == "__main__":
    key = jax.random.PRNGKey(0)
    k_x, k_w, k_g, k_b, k_m, k_v = jax.random.split(key, 6)

    # BasicConv2d(in_channel=4, out_channel=4, kernel_size=3, padding=1)
    n, cin, h, w = 2, 4, 16, 16
    cout, ksize, pad = 4, 3, 1

    x = jax.random.normal(k_x, (n, cin, h, w), jnp.float32)
    params = {
        "conv_w": jax.random.normal(k_w, (cout, cin, ksize, ksize), jnp.float32)
                  / jnp.sqrt(float(cin * ksize * ksize)),
        "bn": {
            "gamma": jax.random.uniform(k_g, (cout,), jnp.float32,
                                        minval=0.5, maxval=1.5),
            "beta": 0.1 * jax.random.normal(k_b, (cout,), jnp.float32),
            "mean": 0.1 * jax.random.normal(k_m, (cout,), jnp.float32),
            "var": jax.random.uniform(k_v, (cout,), jnp.float32,
                                      minval=0.5, maxval=1.5),
        },
    }

    fwd = jax.jit(functools.partial(basic_conv2d_forward,
                                    kernel_size=ksize, padding=pad))
    out = jax.block_until_ready(fwd(x, params))
    assert out.shape == (n, cout, h, w), out.shape
    assert bool(jnp.all(jnp.isfinite(out)))

    ref = basic_conv2d_reference(x, params, kernel_size=ksize, padding=pad)
    max_err = float(jnp.max(jnp.abs(out - ref)))
    assert max_err < 5e-2, f"max abs err vs reference: {max_err}"

    print("KERNEL_OK")
</pallas_src>

<mosaic_0001>
module attributes {stable_mosaic.version = 11 : i64} {
  func.func @_conv_bn_relu_kernel(%arg0: i32, %arg1: i32, %arg2: memref<1x18x18x4xbf16, #tpu.memory_space<vmem>>, %arg3: memref<36x8xbf16, #tpu.memory_space<vmem>>, %arg4: memref<1x8xf32, #tpu.memory_space<vmem>>, %arg5: memref<1x8xf32, #tpu.memory_space<vmem>>, %arg6: memref<1x1x128x8xbf16, #tpu.memory_space<vmem>>) attributes {dimension_semantics = [#tpu.dimension_semantics<parallel>, #tpu.dimension_semantics<parallel>], iteration_bounds = array<i64: 2, 2>, scalar_prefetch = 0 : i64, scratch_operands = 0 : i64, tpu.core_type = #tpu.core_type<tc>, window_params = [{transform_indices = @transform_0, window_bounds = array<i64: 1, 18, 18, 4>}, {pipeline_mode = #tpu.pipeline_mode<synchronous>, transform_indices = @transform_1, window_bounds = array<i64: 36, 8>}, {pipeline_mode = #tpu.pipeline_mode<synchronous>, transform_indices = @transform_2, window_bounds = array<i64: 1, 8>}, {pipeline_mode = #tpu.pipeline_mode<synchronous>, transform_indices = @transform_3, window_bounds = array<i64: 1, 8>}, {transform_indices = @transform_4, window_bounds = array<i64: 1, 1, 128, 8>}]} {
    %c8_i32 = arith.constant 8 : i32
    %0 = arith.muli %arg1, %c8_i32 : i32
    %1 = tpu.assume_multiple %0, 8 : i32
    %c0_i32 = arith.constant 0 : i32
    %2 = arith.addi %1, %c0_i32 : i32
    %c0 = arith.constant 0 : index
    %3 = arith.index_cast %2 : i32 to index
    %c0_0 = arith.constant 0 : index
    %c0_1 = arith.constant 0 : index
    %4 = vector.load %arg2[%c0, %3, %c0_0, %c0_1] : memref<1x18x18x4xbf16, #tpu.memory_space<vmem>>, vector<1x8x16x4xbf16>
    %5 = vector.shape_cast %4 : vector<1x8x16x4xbf16> to vector<8x16x4xbf16>
    %c0_i32_2 = arith.constant 0 : i32
    %6 = arith.addi %1, %c0_i32_2 : i32
    %c0_3 = arith.constant 0 : index
    %7 = arith.index_cast %6 : i32 to index
    %c1 = arith.constant 1 : index
    %c0_4 = arith.constant 0 : index
    %8 = vector.load %arg2[%c0_3, %7, %c1, %c0_4] : memref<1x18x18x4xbf16, #tpu.memory_space<vmem>>, vector<1x8x16x4xbf16>
    %9 = vector.shape_cast %8 : vector<1x8x16x4xbf16> to vector<8x16x4xbf16>
    %c0_i32_5 = arith.constant 0 : i32
    %10 = arith.addi %1, %c0_i32_5 : i32
    %c0_6 = arith.constant 0 : index
    %11 = arith.index_cast %10 : i32 to index
    %c2 = arith.constant 2 : index
    %c0_7 = arith.constant 0 : index
    %12 = vector.load %arg2[%c0_6, %11, %c2, %c0_7] : memref<1x18x18x4xbf16, #tpu.memory_space<vmem>>, vector<1x8x16x4xbf16>
    %13 = vector.shape_cast %12 : vector<1x8x16x4xbf16> to vector<8x16x4xbf16>
    %c1_i32 = arith.constant 1 : i32
    %14 = arith.addi %1, %c1_i32 : i32
    %c0_8 = arith.constant 0 : index
    %15 = arith.index_cast %14 : i32 to index
    %c0_9 = arith.constant 0 : index
    %c0_10 = arith.constant 0 : index
    %16 = vector.load %arg2[%c0_8, %15, %c0_9, %c0_10] : memref<1x18x18x4xbf16, #tpu.memory_space<vmem>>, vector<1x8x16x4xbf16>
    %17 = vector.shape_cast %16 : vector<1x8x16x4xbf16> to vector<8x16x4xbf16>
    %c1_i32_11 = arith.constant 1 : i32
    %18 = arith.addi %1, %c1_i32_11 : i32
    %c0_12 = arith.constant 0 : index
    %19 = arith.index_cast %18 : i32 to index
    %c1_13 = arith.constant 1 : index
    %c0_14 = arith.constant 0 : index
    %20 = vector.load %arg2[%c0_12, %19, %c1_13, %c0_14] : memref<1x18x18x4xbf16, #tpu.memory_space<vmem>>, vector<1x8x16x4xbf16>
    %21 = vector.shape_cast %20 : vector<1x8x16x4xbf16> to vector<8x16x4xbf16>
    %c1_i32_15 = arith.constant 1 : i32
    %22 = arith.addi %1, %c1_i32_15 : i32
    %c0_16 = arith.constant 0 : index
    %23 = arith.index_cast %22 : i32 to index
    %c2_17 = arith.constant 2 : index
    %c0_18 = arith.constant 0 : index
    %24 = vector.load %arg2[%c0_16, %23, %c2_17, %c0_18] : memref<1x18x18x4xbf16, #tpu.memory_space<vmem>>, vector<1x8x16x4xbf16>
    %25 = vector.shape_cast %24 : vector<1x8x16x4xbf16> to vector<8x16x4xbf16>
    %c2_i32 = arith.constant 2 : i32
    %26 = arith.addi %1, %c2_i32 : i32
    %c0_19 = arith.constant 0 : index
    %27 = arith.index_cast %26 : i32 to index
    %c0_20 = arith.constant 0 : index
    %c0_21 = arith.constant 0 : index
    %28 = vector.load %arg2[%c0_19, %27, %c0_20, %c0_21] : memref<1x18x18x4xbf16, #tpu.memory_space<vmem>>, vector<1x8x16x4xbf16>
    %29 = vector.shape_cast %28 : vector<1x8x16x4xbf16> to vector<8x16x4xbf16>
    %c2_i32_22 = arith.constant 2 : i32
    %30 = arith.addi %1, %c2_i32_22 : i32
    %c0_23 = arith.constant 0 : index
    %31 = arith.index_cast %30 : i32 to index
    %c1_24 = arith.constant 1 : index
    %c0_25 = arith.constant 0 : index
    %32 = vector.load %arg2[%c0_23, %31, %c1_24, %c0_25] : memref<1x18x18x4xbf16, #tpu.memory_space<vmem>>, vector<1x8x16x4xbf16>
    %33 = vector.shape_cast %32 : vector<1x8x16x4xbf16> to vector<8x16x4xbf16>
    %c2_i32_26 = arith.constant 2 : i32
    %34 = arith.addi %1, %c2_i32_26 : i32
    %c0_27 = arith.constant 0 : index
    %35 = arith.index_cast %34 : i32 to index
    %c2_28 = arith.constant 2 : index
    %c0_29 = arith.constant 0 : index
    %36 = vector.load %arg2[%c0_27, %35, %c2_28, %c0_29] : memref<1x18x18x4xbf16, #tpu.memory_space<vmem>>, vector<1x8x16x4xbf16>
    %37 = vector.shape_cast %36 : vector<1x8x16x4xbf16> to vector<8x16x4xbf16>
    %38 = tpu.concatenate %5, %9, %13, %17, %21, %25, %29, %33, %37 in 2 : vector<8x16x4xbf16>, vector<8x16x4xbf16>, vector<8x16x4xbf16>, vector<8x16x4xbf16>, vector<8x16x4xbf16>, vector<8x16x4xbf16>, vector<8x16x4xbf16>, vector<8x16x4xbf16>, vector<8x16x4xbf16> -> vector<8x16x36xbf16>
    %39 = vector.shape_cast %38 : vector<8x16x36xbf16> to vector<128x36xbf16>
    %c0_30 = arith.constant 0 : index
    %c0_31 = arith.constant 0 : index
    %40 = vector.load %arg3[%c0_30, %c0_31] : memref<36x8xbf16, #tpu.memory_space<vmem>>, vector<36x8xbf16>
    %cst = arith.constant dense<0.000000e+00> : vector<128x8xf32>
    %41 = tpu.matmul %39, %40, %cst {dimension_numbers = #tpu.dot_dimension_numbers<[1], [0], [0], [1], [0, 0, 1, 1], [], []>} : vector<128x36xbf16>, vector<36x8xbf16>, vector<128x8xf32> -> vector<128x8xf32>
    %c0_32 = arith.constant 0 : index
    %c0_33 = arith.constant 0 : index
    %42 = vector.load %arg4[%c0_32, %c0_33] : memref<1x8xf32, #tpu.memory_space<vmem>>, vector<1x8xf32>
    %43 = vector.broadcast %42 : vector<1x8xf32> to vector<128x8xf32>
    %44 = arith.mulf %41, %43 : vector<128x8xf32>
    %c0_34 = arith.constant 0 : index
    %c0_35 = arith.constant 0 : index
    %45 = vector.load %arg5[%c0_34, %c0_35] : memref<1x8xf32, #tpu.memory_space<vmem>>, vector<1x8xf32>
    %46 = vector.broadcast %45 : vector<1x8xf32> to vector<128x8xf32>
    %47 = arith.addf %44, %46 : vector<128x8xf32>
    %cst_36 = arith.constant 0.000000e+00 : f32
    %48 = vector.broadcast %cst_36 : f32 to vector<128x8xf32>
    %49 = arith.maximumf %47, %48 : vector<128x8xf32>
    %50 = arith.truncf %49 : vector<128x8xf32> to vector<128x8xbf16>
    %c0_37 = arith.constant 0 : index
    %c0_38 = arith.constant 0 : index
    %c0_39 = arith.constant 0 : index
    %c0_40 = arith.constant 0 : index
    %51 = vector.load %arg6[%c0_37, %c0_38, %c0_39, %c0_40] : memref<1x1x128x8xbf16, #tpu.memory_space<vmem>>, vector<1x1x128x8xbf16>
    %52 = vector.shape_cast %51 : vector<1x1x128x8xbf16> to vector<128x8xbf16>
    %53 = vector.shape_cast %50 : vector<128x8xbf16> to vector<1x1x128x8xbf16>
    tpu.vector_store %arg6[%c0_37, %c0_38, %c0_39, %c0_40], %53 {strides = array<i32>} : memref<1x1x128x8xbf16, #tpu.memory_space<vmem>>, vector<1x1x128x8xbf16>,
    return
  }
  func.func @transform_0(%arg0: i32, %arg1: i32) -> (i32, i32, i32, i32) {
    %c0_i32 = arith.constant 0 : i32
    %c0_i32_0 = arith.constant 0 : i32
    %c0_i32_1 = arith.constant 0 : i32
    %c0_i32_2 = arith.constant 0 : i32
    return %arg0, %c0_i32, %c0_i32_0, %c0_i32_1 : i32, i32, i32, i32
  }
  func.func @transform_1(%arg0: i32, %arg1: i32) -> (i32, i32) {
    %c0_i32 = arith.constant 0 : i32
    %c0_i32_0 = arith.constant 0 : i32
    %c0_i32_1 = arith.constant 0 : i32
    return %c0_i32, %c0_i32_0 : i32, i32
  }
  func.func @transform_2(%arg0: i32, %arg1: i32) -> (i32, i32) {
    %c0_i32 = arith.constant 0 : i32
    %c0_i32_0 = arith.constant 0 : i32
    %c0_i32_1 = arith.constant 0 : i32
    return %c0_i32, %c0_i32_0 : i32, i32
  }
  func.func @transform_3(%arg0: i32, %arg1: i32) -> (i32, i32) {
    %c0_i32 = arith.constant 0 : i32
    %c0_i32_0 = arith.constant 0 : i32
    %c0_i32_1 = arith.constant 0 : i32
    return %c0_i32, %c0_i32_0 : i32, i32
  }
  func.func @transform_4(%arg0: i32, %arg1: i32) -> (i32, i32, i32, i32) {
    %c0_i32 = arith.constant 0 : i32
    %c0_i32_0 = arith.constant 0 : i32
    %c0_i32_1 = arith.constant 0 : i32
    return %arg0, %arg1, %c0_i32, %c0_i32_0 : i32, i32, i32, i32
  }
}

</mosaic_0001>

<llo_original>
// kernel: basic_conv2d_forward.1
$region0: #{basic_conv2d_forward.1}
  #allocation0 [shape = 'u32[]', space=smem, size = 0x4, offset = 0x4, fixed_abs, tag = 'smem constant byte address 0x4 - core index']
  #allocation1 [shape = 'u32[144,128]{1,0:T(1,128)}', space=vmem, size = 0x12000, scoped, tag = 'internal scratch']
  %s0 = inlined_call_operand.vmem [shape: bf16[2,18,18,4], index: 0, kind: input, shape index: {}]
  %s1 = inlined_call_operand.vmem [shape: bf16[36,8], index: 1, kind: input, shape index: {}]
  %s2 = inlined_call_operand.vmem [shape: f32[1,8], index: 2, kind: input, shape index: {}]
  %s3 = inlined_call_operand.vmem [shape: f32[1,8], index: 3, kind: input, shape index: {}]
  %s4 = inlined_call_operand.vmem [shape: bf16[2,2,128,8], index: 4, kind: output, shape index: {}]
  %s5 = sld [smem:[#allocation0]]
  $region49: #{basic_conv2d_forward.1} parent=0
    _
  %s7 = ssub.s32 1, %s5
  %s8 = scalar_select 0, %s7, %s5
  loop: start=0, step=1, limit=6
  $region2: #{basic_conv2d_forward.1} parent=0 // loop_pre_header
    _
  $region3: #{basic_conv2d_forward.1} parent=0 // loop_header
    %s10 = sphi 0, %s14
    %p11 = scmp.ge.s32.totalorder %s10, 6
    %s17 = sphi 0, %s29
    %s18 = sphi 0, %s25
    %s19 = sphi 0, %s17
    %s20 = sphi 0, %s18
    %s21 = sphi 0, %s19
    %s22 = sphi 0, %s20
    %s32 = sphi 0, %s34
    %s35 = sphi 0, %s32
    %s36 = sphi 0, %s35
    %s52 = sphi 0, %s36
    %s56 = sphi 0, %s56
    %s58 = sphi 0, %s56
    %s59 = sphi 0, %s58
    %s73 = sphi 0, %s59
    %s77 = sphi 0, %s77
    %s79 = sphi 0, %s77
    %s80 = sphi 0, %s79
    %s94 = sphi 0, %s80
    %s98 = sphi 0, %s98
    %s100 = sphi 0, %s98
    %s101 = sphi 0, %s100
    %s115 = sphi 0, %s101
    %s123 = sphi 0, %s125
    %s126 = sphi 0, %s123
    %s127 = sphi 0, %s126
    %s143 = sphi 0, %s127
  $region4: #{basic_conv2d_forward.1} parent=0 // loop_header_branch
    %13 = sbr.rel (%p11) target = $region8
  $region5: #{basic_conv2d_forward.1} parent=0 // loop_body
    %s15 = ssub.s32 %s10, 1
    %s16 = ssub.s32 %s10, 2
    %s23 = sadd.s32 1, %s18
    %p24 = scmp.ge.s32.totalorder %s23, 2
    %s25 = scalar_select %p24, 0, %s23
    %s26 = sadd.s32 1, %s17
    %s27 = scalar_select %p24, %s26, %s17
    %p28 = scmp.ge.s32.totalorder %s27, 2
    %s29 = scalar_select %p28, 0, %s27
    %s30 = ssub.s32 %s17, %s29
    %p31 = scmp.eq.s32.totalorder %s30, 0
    %s33 = sadd.s32 %s32, 1
    %s34 = scalar_select %p31, %s32, %s33
    %p37 = pneg %p31
    %p38 = scmp.eq.s32.totalorder %s10, 3
    %p39 = por %p37, %p38
    %p40 = scmp.ne.s32.totalorder %s32, %s35
    %p41 = scmp.eq.s32.totalorder %s10, 0
    %p42 = por %p40, %p41
    %p43 = scmp.ne.s32.totalorder %s32, %s35
    %p44 = scmp.eq.s32.totalorder %s15, 3
    %p45 = por %p43, %p44
    %p46 = scmp.ne.s32.totalorder %s35, %s36
    %p47 = scmp.eq.s32.totalorder %s15, 0
    %p48 = por %p46, %p47
    %p49 = scmp.ne.s32.totalorder %s35, %s36
    %p50 = scmp.eq.s32.totalorder %s16, 3
    %p51 = por %p49, %p50
    %p53 = scmp.ne.s32.totalorder %s36, %s52
    %p54 = scmp.eq.s32.totalorder %s16, 0
    %p55 = por %p53, %p54
    %s57 = sadd.s32 %s56, 1
    %p60 = scmp.eq.s32.totalorder %s10, 3
    %p61 = scmp.ne.s32.totalorder %s56, %s58
    %p62 = scmp.eq.s32.totalorder %s10, 0
    %p63 = por %p61, %p62
    %p64 = scmp.ne.s32.totalorder %s56, %s58
    %p65 = scmp.eq.s32.totalorder %s15, 3
    %p66 = por %p64, %p65
    %p67 = scmp.ne.s32.totalorder %s58, %s59
    %p68 = scmp.eq.s32.totalorder %s15, 0
    %p69 = por %p67, %p68
    %p70 = scmp.ne.s32.totalorder %s58, %s59
    %p71 = scmp.eq.s32.totalorder %s16, 3
    %p72 = por %p70, %p71
    %p74 = scmp.ne.s32.totalorder %s59, %s73
    %p75 = scmp.eq.s32.totalorder %s16, 0
    %p76 = por %p74, %p75
    %s78 = sadd.s32 %s77, 1
    %p81 = scmp.eq.s32.totalorder %s10, 3
    %p82 = scmp.ne.s32.totalorder %s77, %s79
    %p83 = scmp.eq.s32.totalorder %s10, 0
    %p84 = por %p82, %p83
    %p85 = scmp.ne.s32.totalorder %s77, %s79
    %p86 = scmp.eq.s32.totalorder %s15, 3
    %p87 = por %p85, %p86
    %p88 = scmp.ne.s32.totalorder %s79, %s80
    %p89 = scmp.eq.s32.totalorder %s15, 0
    %p90 = por %p88, %p89
    %p91 = scmp.ne.s32.totalorder %s79, %s80
    %p92 = scmp.eq.s32.totalorder %s16, 3
    %p93 = por %p91, %p92
    %p95 = scmp.ne.s32.totalorder %s80, %s94
    %p96 = scmp.eq.s32.totalorder %s16, 0
    %p97 = por %p95, %p96
    %s99 = sadd.s32 %s98, 1
    %p102 = scmp.eq.s32.totalorder %s10, 3
    %p103 = scmp.ne.s32.totalorder %s98, %s100
    %p104 = scmp.eq.s32.totalorder %s10, 0
    %p105 = por %p103, %p104
    %p106 = scmp.ne.s32.totalorder %s98, %s100
    %p107 = scmp.eq.s32.totalorder %s15, 3
    %p108 = por %p106, %p107
    %p109 = scmp.ne.s32.totalorder %s100, %s101
    %p110 = scmp.eq.s32.totalorder %s15, 0
    %p111 = por %p109, %p110
    %p112 = scmp.ne.s32.totalorder %s100, %s101
    %p113 = scmp.eq.s32.totalorder %s16, 3
    %p114 = por %p112, %p113
    %p116 = scmp.ne.s32.totalorder %s101, %s115
    %p117 = scmp.eq.s32.totalorder %s16, 0
    %p118 = por %p116, %p117
    %s119 = ssub.s32 %s17, %s29
    %s120 = ssub.s32 %s18, %s25
    %s121 = sor.u32 %s119, %s120
    %p122 = scmp.eq.s32.totalorder %s121, 0
    %s124 = sadd.s32 %s123, 1
    %s125 = scalar_select %p122, %s123, %s124
    %p128 = pneg %p122
    %p129 = scmp.eq.s32.totalorder %s10, 3
    %p130 = por %p128, %p129
    %p131 = scmp.ne.s32.totalorder %s123, %s126
    %p132 = scmp.eq.s32.totalorder %s10, 0
    %p133 = por %p131, %p132
    %p134 = scmp.ne.s32.totalorder %s123, %s126
    %p135 = scmp.eq.s32.totalorder %s15, 3
    %p136 = por %p134, %p135
    %p137 = scmp.ne.s32.totalorder %s126, %s127
    %p138 = scmp.eq.s32.totalorder %s15, 0
    %p139 = por %p137, %p138
    %p140 = scmp.ne.s32.totalorder %s126, %s127
    %p141 = scmp.eq.s32.totalorder %s16, 3
    %p142 = por %p140, %p141
    %p144 = scmp.ne.s32.totalorder %s127, %s143
    %p145 = scmp.eq.s32.totalorder %s16, 0
    %p146 = por %p144, %p145
    %p147 = scmp.le.s32.totalorder 1, %s10
    %p148 = scmp.lt.s32.totalorder %s10, 5
    %p149 = pnand %p147, %p148
    %p150 = pneg %p149
    // Predicated region
    $region9: #{basic_conv2d_forward.1} parent=5 // pred_check
      _
    $region10: #{basic_conv2d_forward.1} parent=5 // pred_check_branch
      %152 = sbr.rel (%p149) target = $region12
    $region11: #{basic_conv2d_forward.1} parent=5 // pred_region
      %s153 = ssub.s32 %s10, 1
      // Predicated region
      $region13: #{basic_conv2d_forward.1} parent=11 // pred_check
        %p154 = pneg %p69
      $region14: #{basic_conv2d_forward.1} parent=11 // pred_check_branch
        %156 = sbr.rel (%p154) target = $region16
      $region15: #{basic_conv2d_forward.1} parent=11 // pred_region
        _
      $region16: #{basic_conv2d_forward.1} parent=11 // pred_fallthru
        _
      // Predicated region
      $region17: #{basic_conv2d_forward.1} parent=11 // pred_check
        %p157 = pneg %p90
      $region18: #{basic_conv2d_forward.1} parent=11 // pred_check_branch
        %159 = sbr.rel (%p157) target = $region20
      $region19: #{basic_conv2d_forward.1} parent=11 // pred_region
        _
      $region20: #{basic_conv2d_forward.1} parent=11 // pred_fallthru
        _
      // Predicated region
      $region21: #{basic_conv2d_forward.1} parent=11 // pred_check
        %p160 = pneg %p111
      $region22: #{basic_conv2d_forward.1} parent=11 // pred_check_branch
        %162 = sbr.rel (%p160) target = $region24
      $region23: #{basic_conv2d_forward.1} parent=11 // pred_region
        _
      $region24: #{basic_conv2d_forward.1} parent=11 // pred_fallthru
        _
    $region12: #{basic_conv2d_forward.1} parent=5 // pred_fallthru
      _
    %p163 = scmp.lt.s32.totalorder %s10, 4
    // Predicated region
    $region25: #{basic_conv2d_forward.1} parent=5 // pred_check
      %p164 = pneg %p163
    $region26: #{basic_conv2d_forward.1} parent=5 // pred_check_branch
      %166 = sbr.rel (%p164) target = $region28
    $region27: #{basic_conv2d_forward.1} parent=5 // pred_region
      // Predicated region
      $region29: #{basic_conv2d_forward.1} parent=27 // pred_check
        %p167 = pneg %p42
      $region30: #{basic_conv2d_forward.1} parent=27 // pred_check_branch
        %169 = sbr.rel (%p167) target = $region32
      $region31: #{basic_conv2d_forward.1} parent=27 // pred_region
        %p170 = scmp.lt.s32.totalorder %s17, 1
        %s171 = scalar_select %p170, %s17, 1
        %s172 = smul.addr %s171, 54
        %s173 = smul.addr %s172, 4
        %s174 = scalar_lea.vmem %s0, %s173
      $region32: #{basic_conv2d_forward.1} parent=27 // pred_fallthru
        _
    $region28: #{basic_conv2d_forward.1} parent=5 // pred_fallthru
      _
    %p175 = scmp.le.s32.totalorder 1, %s10
    %p176 = scmp.lt.s32.totalorder %s10, 5
    %p177 = pnand %p175, %p176
    %p178 = pneg %p177
    // Predicated region
    $region33: #{basic_conv2d_forward.1} parent=5 // pred_check
      _
    $region34: #{basic_conv2d_forward.1} parent=5 // pred_check_branch
      %180 = sbr.rel (%p177) target = $region36
    $region35: #{basic_conv2d_forward.1} parent=5 // pred_region
      %s181 = ssub.s32 %s10, 1
      %p182 = scmp.lt.s32.totalorder %s19, 1
      %s183 = scalar_select %p182, %s19, 1
      %s184 = smul.addr %s183, 54
      %s185 = smul.addr %s184, 4
      %s186 = scalar_lea.vmem %s0, %s185
      %p187 = pneg %p48
      %p188 = pneg %p45
      %p189 = pneg %p69
      %p190 = pneg %p66
      %p191 = pneg %p90
      %p192 = pneg %p87
      %p193 = pneg %p111
      %p194 = pneg %p108
      %p195 = pneg %p139
      %p196 = pneg %p136
      %p197 = scmp.lt.s32.totalorder %s19, 1
      %s198 = scalar_select %p197, %s19, 1
      %p199 = scmp.lt.s32.totalorder %s20, 1
      %s200 = scalar_select %p199, %s20, 1
      %s201 = smul.addr %s200, 16
      %s202 = smul.addr %s198, 32
      %s203 = sadd.s32 %s201, %s202
      %s204 = smul.addr %s203, 4
      %s205 = scalar_lea.vmem %s4, %s204
      %p206 = scmp.lt.s32.totalorder %s19, 1
      %s207 = scalar_select %p206, %s19, 1
      %s208 = smul.addr %s207, 54
      %s209 = smul.addr %s208, 4
      %s210 = scalar_lea.vmem %s0, %s209
      %p211 = scmp.lt.s32.totalorder %s19, 1
      %s212 = scalar_select %p211, %s19, 1
      %p213 = scmp.lt.s32.totalorder %s20, 1
      %s214 = scalar_select %p213, %s20, 1
      %s215 = smul.addr %s214, 16
      %s216 = smul.addr %s212, 32
      %s217 = sadd.s32 %s215, %s216
      %s218 = smul.addr %s217, 4
      %s219 = scalar_lea.vmem %s4, %s218
      %s221 = smul.u32 %s20, 8
      %s222 = smul.u32 %s221, 3
      %s223 = smul.addr %s222, 4
      %s224 = scalar_lea.vmem %s210, %s223
      %v225 = vld [vmem:[%s224] sm:$0xf]
      %v226 = vld [vmem:[%s224 + $0x4] sm:$0xf]
      %v227 = vld [vmem:[%s224 + $0xc] sm:$0xf]
      %v228 = vld [vmem:[%s224 + $0x10] sm:$0xf]
      %v229 = vld [vmem:[%s224 + $0x18] sm:$0xf]
      %v230 = vld [vmem:[%s224 + $0x1c] sm:$0xf]
      %v231 = vld [vmem:[%s224 + $0x24] sm:$0xf]
      %v232 = vld [vmem:[%s224 + $0x28] sm:$0xf]
      %v233 = vld [vmem:[%s224 + $0x30] sm:$0xf]
      %v234 = vld [vmem:[%s224 + $0x34] sm:$0xf]
      %v235 = vld [vmem:[%s224 + $0x3c] sm:$0xf]
      %v236 = vld [vmem:[%s224 + $0x40] sm:$0xf]
      %v237 = vld [vmem:[%s224 + $0x48] sm:$0xf]
      %v238 = vld [vmem:[%s224 + $0x4c] sm:$0xf]
      %v239 = vld [vmem:[%s224 + $0x54] sm:$0xf]
      %v240 = vld [vmem:[%s224 + $0x58] sm:$0xf]
      %v241 = vld [vmem:[%s224 + $0x8] sm:$0x1]
      %v242 = vld [vmem:[%s224 + $0x14] sm:$0x1]
      %v243 = vld [vmem:[%s224 + $0x20] sm:$0x1]
      %v244 = vld [vmem:[%s224 + $0x2c] sm:$0x1]
      %v245 = vld [vmem:[%s224 + $0x38] sm:$0x1]
      %v246 = vld [vmem:[%s224 + $0x44] sm:$0x1]
      %v247 = vld [vmem:[%s224 + $0x50] sm:$0x1]
      %v248 = vld [vmem:[%s224 + $0x5c] sm:$0x1]
      %v249 = vld [vmem:[%s224] sm:$0xe]
      %v250 = vld [vmem:[%s224 + $0xc] sm:$0xe]
      %v251 = vld [vmem:[%s224 + $0x18] sm:$0xe]
      %v252 = vld [vmem:[%s224 + $0x24] sm:$0xe]
      %v253 = vld [vmem:[%s224 + $0x30] sm:$0xe]
      %v254 = vld [vmem:[%s224 + $0x3c] sm:$0xe]
      %v255 = vld [vmem:[%s224 + $0x48] sm:$0xe]
      %v256 = vld [vmem:[%s224 + $0x54] sm:$0xe]
      %s257 = sadd.s32 %s221, 1
      %s258 = smul.u32 %s257, 3
      %s259 = smul.addr %s258, 4
      %s260 = scalar_lea.vmem %s210, %s259
      %v261 = vld [vmem:[%s260] sm:$0xf]
      %v262 = vld [vmem:[%s260 + $0x4] sm:$0xf]
      %v263 = vld [vmem:[%s260 + $0xc] sm:$0xf]
      %v264 = vld [vmem:[%s260 + $0x10] sm:$0xf]
      %v265 = vld [vmem:[%s260 + $0x18] sm:$0xf]
      %v266 = vld [vmem:[%s260 + $0x1c] sm:$0xf]
      %v267 = vld [vmem:[%s260 + $0x24] sm:$0xf]
      %v268 = vld [vmem:[%s260 + $0x28] sm:$0xf]
      %v269 = vld [vmem:[%s260 + $0x30] sm:$0xf]
      %v270 = vld [vmem:[%s260 + $0x34] sm:$0xf]
      %v271 = vld [vmem:[%s260 + $0x3c] sm:$0xf]
      %v272 = vld [vmem:[%s260 + $0x40] sm:$0xf]
      %v273 = vld [vmem:[%s260 + $0x48] sm:$0xf]
      %v274 = vld [vmem:[%s260 + $0x4c] sm:$0xf]
      %v275 = vld [vmem:[%s260 + $0x54] sm:$0xf]
      %v276 = vld [vmem:[%s260 + $0x58] sm:$0xf]
      %v277 = vld [vmem:[%s260 + $0x8] sm:$0x1]
      %v278 = vld [vmem:[%s260 + $0x14] sm:$0x1]
      %v279 = vld [vmem:[%s260 + $0x20] sm:$0x1]
      %v280 = vld [vmem:[%s260 + $0x2c] sm:$0x1]
      %v281 = vld [vmem:[%s260 + $0x38] sm:$0x1]
      %v282 = vld [vmem:[%s260 + $0x44] sm:$0x1]
      %v283 = vld [vmem:[%s260 + $0x50] sm:$0x1]
      %v284 = vld [vmem:[%s260 + $0x5c] sm:$0x1]
      %v285 = vld [vmem:[%s260] sm:$0xe]
      %v286 = vld [vmem:[%s260 + $0xc] sm:$0xe]
      %v287 = vld [vmem:[%s260 + $0x18] sm:$0xe]
      %v288 = vld [vmem:[%s260 + $0x24] sm:$0xe]
      %v289 = vld [vmem:[%s260 + $0x30] sm:$0xe]
      %v290 = vld [vmem:[%s260 + $0x3c] sm:$0xe]
      %v291 = vld [vmem:[%s260 + $0x48] sm:$0xe]
      %v292 = vld [vmem:[%s260 + $0x54] sm:$0xe]
      %s293 = sadd.s32 %s221, 2
      %s294 = smul.u32 %s293, 3
      %s295 = smul.addr %s294, 4
      %s296 = scalar_lea.vmem %s210, %s295
      %v297 = vld [vmem:[%s296] sm:$0xf]
      %v298 = vld [vmem:[%s296 + $0x4] sm:$0xf]
      %v299 = vld [vmem:[%s296 + $0xc] sm:$0xf]
      %v300 = vld [vmem:[%s296 + $0x10] sm:$0xf]
      %v301 = vld [vmem:[%s296 + $0x18] sm:$0xf]
      %v302 = vld [vmem:[%s296 + $0x1c] sm:$0xf]
      %v303 = vld [vmem:[%s296 + $0x24] sm:$0xf]
      %v304 = vld [vmem:[%s296 + $0x28] sm:$0xf]
      %v305 = vld [vmem:[%s296 + $0x30] sm:$0xf]
      %v306 = vld [vmem:[%s296 + $0x34] sm:$0xf]
      %v307 = vld [vmem:[%s296 + $0x3c] sm:$0xf]
      %v308 = vld [vmem:[%s296 + $0x40] sm:$0xf]
      %v309 = vld [vmem:[%s296 + $0x48] sm:$0xf]
      %v310 = vld [vmem:[%s296 + $0x4c] sm:$0xf]
      %v311 = vld [vmem:[%s296 + $0x54] sm:$0xf]
      %v312 = vld [vmem:[%s296 + $0x58] sm:$0xf]
      %v313 = vld [vmem:[%s296 + $0x8] sm:$0x1]
      %v314 = vld [vmem:[%s296 + $0x14] sm:$0x1]
      %v315 = vld [vmem:[%s296 + $0x20] sm:$0x1]
      %v316 = vld [vmem:[%s296 + $0x2c] sm:$0x1]
      %v317 = vld [vmem:[%s296 + $0x38] sm:$0x1]
      %v318 = vld [vmem:[%s296 + $0x44] sm:$0x1]
      %v319 = vld [vmem:[%s296 + $0x50] sm:$0x1]
      %v320 = vld [vmem:[%s296 + $0x5c] sm:$0x1]
      %v321 = vld [vmem:[%s296] sm:$0xe]
      %v322 = vld [vmem:[%s296 + $0xc] sm:$0xe]
      %v323 = vld [vmem:[%s296 + $0x18] sm:$0xe]
      %v324 = vld [vmem:[%s296 + $0x24] sm:$0xe]
      %v325 = vld [vmem:[%s296 + $0x30] sm:$0xe]
      %v326 = vld [vmem:[%s296 + $0x3c] sm:$0xe]
      %v327 = vld [vmem:[%s296 + $0x48] sm:$0xe]
      %v328 = vld [vmem:[%s296 + $0x54] sm:$0xe]
      %v345 = vunpack.c.l.b16 %v225
      %v346 = vunpack.c.l.b16 %v226
      %v347 = vunpack.c.l.b16 %v227
      %v348 = vunpack.c.l.b16 %v228
      %v349 = vunpack.c.l.b16 %v229
      %v350 = vunpack.c.l.b16 %v230
      %v351 = vunpack.c.l.b16 %v231
      %v352 = vunpack.c.l.b16 %v232
      %v353 = vunpack.c.l.b16 %v233
      %v354 = vunpack.c.l.b16 %v234
      %v355 = vunpack.c.l.b16 %v235
      %v356 = vunpack.c.l.b16 %v236
      %v357 = vunpack.c.l.b16 %v237
      %v358 = vunpack.c.l.b16 %v238
      %v359 = vunpack.c.l.b16 %v239
      %v360 = vunpack.c.l.b16 %v240
      %v361 = vpack.c.b16 %v346, %v345
      %v362 = vpack.c.b16 %v348, %v347
      %v363 = vpack.c.b16 %v350, %v349
      %v364 = vpack.c.b16 %v352, %v351
      %v365 = vpack.c.b16 %v354, %v353
      %v366 = vpack.c.b16 %v356, %v355
      %v367 = vpack.c.b16 %v358, %v357
      %v368 = vpack.c.b16 %v360, %v359
      %v377 = vunpack.c.l.b16 %v241
      %v378 = vunpack.c.l.b16 %v242
      %v379 = vunpack.c.l.b16 %v243
      %v380 = vunpack.c.l.b16 %v244
      %v381 = vunpack.c.l.b16 %v245
      %v382 = vunpack.c.l.b16 %v246
      %v383 = vunpack.c.l.b16 %v247
      %v384 = vunpack.c.l.b16 %v248
      %v385 = vpack.c.b16 %v377, %v377
      %v386 = vpack.c.b16 %v378, %v378
      %v387 = vpack.c.b16 %v379, %v379
      %v388 = vpack.c.b16 %v380, %v380
      %v389 = vpack.c.b16 %v381, %v381
      %v390 = vpack.c.b16 %v382, %v382
      %v391 = vpack.c.b16 %v383, %v383
      %v392 = vpack.c.b16 %v384, %v384
      %vm393 = vsmask.f32 7424
      %v395 = vshrl.u32 %v361, 16
      %v397 = vshll.u32 %v361, 16
      %v399 = vrot.slane %v397, 1
      %v400 = vor.u32 %v395, %v399
      %v402 = vshll.u32 %v385, 16
      %v404 = vrot.slane %v402, 1
      %v405 = vsel %vm393, %v400, %v404
      %v407 = vshrl.u32 %v362, 16
      %v409 = vshll.u32 %v362, 16
      %v411 = vrot.slane %v409, 1
      %v412 = vor.u32 %v407, %v411
      %v414 = vshll.u32 %v386, 16
      %v416 = vrot.slane %v414, 1
      %v417 = vsel %vm393, %v412, %v416
      %v419 = vshrl.u32 %v363, 16
      %v421 = vshll.u32 %v363, 16
      %v423 = vrot.slane %v421, 1
      %v424 = vor.u32 %v419, %v423
      %v426 = vshll.u32 %v387, 16
      %v428 = vrot.slane %v426, 1
      %v429 = vsel %vm393, %v424, %v428
      %v431 = vshrl.u32 %v364, 16
      %v433 = vshll.u32 %v364, 16
      %v435 = vrot.slane %v433, 1
      %v436 = vor.u32 %v431, %v435
      %v438 = vshll.u32 %v388, 16
      %v440 = vrot.slane %v438, 1
      %v441 = vsel %vm393, %v436, %v440
      %v443 = vshrl.u32 %v365, 16
      %v445 = vshll.u32 %v365, 16
      %v447 = vrot.slane %v445, 1
      %v448 = vor.u32 %v443, %v447
      %v450 = vshll.u32 %v389, 16
      %v452 = vrot.slane %v450, 1
      %v453 = vsel %vm393, %v448, %v452
      %v455 = vshrl.u32 %v366, 16
      %v457 = vshll.u32 %v366, 16
      %v459 = vrot.slane %v457, 1
      %v460 = vor.u32 %v455, %v459
      %v462 = vshll.u32 %v390, 16
      %v464 = vrot.slane %v462, 1
      %v465 = vsel %vm393, %v460, %v464
      %v467 = vshrl.u32 %v367, 16
      %v469 = vshll.u32 %v367, 16
      %v471 = vrot.slane %v469, 1
      %v472 = vor.u32 %v467, %v471
      %v474 = vshll.u32 %v391, 16
      %v476 = vrot.slane %v474, 1
      %v477 = vsel %vm393, %v472, %v476
      %v479 = vshrl.u32 %v368, 16
      %v481 = vshll.u32 %v368, 16
      %v483 = vrot.slane %v481, 1
      %v484 = vor.u32 %v479, %v483
      %v486 = vshll.u32 %v392, 16
      %v488 = vrot.slane %v486, 1
      %v489 = vsel %vm393, %v484, %v488
      %490 = vrot.lane.b32.xlu0 %v405, 4
      %v491 = vpop.permute.xlu0 %490
      %492 = vrot.lane.b32.xlu0 %v417, 4
      %v493 = vpop.permute.xlu0 %492
      %494 = vrot.lane.b32.xlu0 %v429, 4
      %v495 = vpop.permute.xlu0 %494
      %496 = vrot.lane.b32.xlu0 %v441, 4
      %v497 = vpop.permute.xlu0 %496
      %498 = vrot.lane.b32.xlu0 %v453, 4
      %v499 = vpop.permute.xlu0 %498
      %500 = vrot.lane.b32.xlu0 %v465, 4
      %v501 = vpop.permute.xlu0 %500
      %502 = vrot.lane.b32.xlu0 %v477, 4
      %v503 = vpop.permute.xlu0 %502
      %504 = vrot.lane.b32.xlu0 %v489, 4
      %v505 = vpop.permute.xlu0 %504
      %v514 = vunpack.c.l.b16 %v249
      %v515 = vunpack.c.l.b16 %v250
      %v516 = vunpack.c.l.b16 %v251
      %v517 = vunpack.c.l.b16 %v252
      %v518 = vunpack.c.l.b16 %v253
      %v519 = vunpack.c.l.b16 %v254
      %v520 = vunpack.c.l.b16 %v255
      %v521 = vunpack.c.l.b16 %v256
      %v522 = vpack.c.b16 %v346, %v514
      %v523 = vpack.c.b16 %v348, %v515
      %v524 = vpack.c.b16 %v350, %v516
      %v525 = vpack.c.b16 %v352, %v517
      %v526 = vpack.c.b16 %v354, %v518
      %v527 = vpack.c.b16 %v356, %v519
      %v528 = vpack.c.b16 %v358, %v520
      %v529 = vpack.c.b16 %v360, %v521
      %vm530 = vcmask 1046528
      %v531 = vrot.slane %v522, 1
      %v532 = vrot.slane %v385, 1
      %v533 = vsel %vm530, %v531, %v532
      %v534 = vrot.slane %v523, 1
      %v535 = vrot.slane %v386, 1
      %v536 = vsel %vm530, %v534, %v535
      %v537 = vrot.slane %v524, 1
      %v538 = vrot.slane %v387, 1
      %v539 = vsel %vm530, %v537, %v538
      %v540 = vrot.slane %v525, 1
      %v541 = vrot.slane %v388, 1
      %v542 = vsel %vm530, %v540, %v541
      %v543 = vrot.slane %v526, 1
      %v544 = vrot.slane %v389, 1
      %v545 = vsel %vm530, %v543, %v544
      %v546 = vrot.slane %v527, 1
      %v547 = vrot.slane %v390, 1
      %v548 = vsel %vm530, %v546, %v547
      %v549 = vrot.slane %v528, 1
      %v550 = vrot.slane %v391, 1
      %v551 = vsel %vm530, %v549, %v550
      %v552 = vrot.slane %v529, 1
      %v553 = vrot.slane %v392, 1
      %v554 = vsel %vm530, %v552, %v553
      %555 = vrot.lane.b32.xlu0 %v533, 8
      %v556 = vpop.permute.xlu0 %555
      %557 = vrot.lane.b32.xlu0 %v536, 8
      %v558 = vpop.permute.xlu0 %557
      %559 = vrot.lane.b32.xlu0 %v539, 8
      %v560 = vpop.permute.xlu0 %559
      %561 = vrot.lane.b32.xlu0 %v542, 8
      %v562 = vpop.permute.xlu0 %561
      %563 = vrot.lane.b32.xlu0 %v545, 8
      %v564 = vpop.permute.xlu0 %563
      %565 = vrot.lane.b32.xlu0 %v548, 8
      %v566 = vpop.permute.xlu0 %565
      %567 = vrot.lane.b32.xlu0 %v551, 8
      %v568 = vpop.permute.xlu0 %567
      %569 = vrot.lane.b32.xlu0 %v554, 8
      %v570 = vpop.permute.xlu0 %569
      %v587 = vunpack.c.l.b16 %v261
      %v588 = vunpack.c.l.b16 %v262
      %v589 = vunpack.c.l.b16 %v263
      %v590 = vunpack.c.l.b16 %v264
      %v591 = vunpack.c.l.b16 %v265
      %v592 = vunpack.c.l.b16 %v266
      %v593 = vunpack.c.l.b16 %v267
      %v594 = vunpack.c.l.b16 %v268
      %v595 = vunpack.c.l.b16 %v269
      %v596 = vunpack.c.l.b16 %v270
      %v597 = vunpack.c.l.b16 %v271
      %v598 = vunpack.c.l.b16 %v272
      %v599 = vunpack.c.l.b16 %v273
      %v600 = vunpack.c.l.b16 %v274
      %v601 = vunpack.c.l.b16 %v275
      %v602 = vunpack.c.l.b16 %v276
      %v603 = vpack.c.b16 %v588, %v587
      %v604 = vpack.c.b16 %v590, %v589
      %v605 = vpack.c.b16 %v592, %v591
      %v606 = vpack.c.b16 %v594, %v593
      %v607 = vpack.c.b16 %v596, %v595
      %v608 = vpack.c.b16 %v598, %v597
      %v609 = vpack.c.b16 %v600, %v599
      %v610 = vpack.c.b16 %v602, %v601
      %611 = vrot.lane.b32.xlu0 %v603, 12
      %v612 = vpop.permute.xlu0 %611
      %613 = vrot.lane.b32.xlu0 %v604, 12
      %v614 = vpop.permute.xlu0 %613
      %615 = vrot.lane.b32.xlu0 %v605, 12
      %v616 = vpop.permute.xlu0 %615
      %617 = vrot.lane.b32.xlu0 %v606, 12
      %v618 = vpop.permute.xlu0 %617
      %619 = vrot.lane.b32.xlu0 %v607, 12
      %v620 = vpop.permute.xlu0 %619
      %621 = vrot.lane.b32.xlu0 %v608, 12
      %v622 = vpop.permute.xlu0 %621
      %623 = vrot.lane.b32.xlu0 %v609, 12
      %v624 = vpop.permute.xlu0 %623
      %625 = vrot.lane.b32.xlu0 %v610, 12
      %v626 = vpop.permute.xlu0 %625
      %v635 = vunpack.c.l.b16 %v277
      %v636 = vunpack.c.l.b16 %v278
      %v637 = vunpack.c.l.b16 %v279
      %v638 = vunpack.c.l.b16 %v280
      %v639 = vunpack.c.l.b16 %v281
      %v640 = vunpack.c.l.b16 %v282
      %v641 = vunpack.c.l.b16 %v283
      %v642 = vunpack.c.l.b16 %v284
      %v643 = vpack.c.b16 %v635, %v635
      %v644 = vpack.c.b16 %v636, %v636
      %v645 = vpack.c.b16 %v637, %v637
      %v646 = vpack.c.b16 %v638, %v638
      %v647 = vpack.c.b16 %v639, %v639
      %v648 = vpack.c.b16 %v640, %v640
      %v649 = vpack.c.b16 %v641, %v641
      %v650 = vpack.c.b16 %v642, %v642
      %v652 = vshrl.u32 %v603, 16
      %v654 = vshll.u32 %v603, 16
      %v656 = vrot.slane %v654, 1
      %v657 = vor.u32 %v652, %v656
      %v659 = vshll.u32 %v643, 16
      %v661 = vrot.slane %v659, 1
      %v662 = vsel %vm393, %v657, %v661
      %v664 = vshrl.u32 %v604, 16
      %v666 = vshll.u32 %v604, 16
      %v668 = vrot.slane %v666, 1
      %v669 = vor.u32 %v664, %v668
      %v671 = vshll.u32 %v644, 16
      %v673 = vrot.slane %v671, 1
      %v674 = vsel %vm393, %v669, %v673
      %v676 = vshrl.u32 %v605, 16
      %v678 = vshll.u32 %v605, 16
      %v680 = vrot.slane %v678, 1
      %v681 = vor.u32 %v676, %v680
      %v683 = vshll.u32 %v645, 16
      %v685 = vrot.slane %v683, 1
      %v686 = vsel %vm393, %v681, %v685
      %v688 = vshrl.u32 %v606, 16
      %v690 = vshll.u32 %v606, 16
      %v692 = vrot.slane %v690, 1
      %v693 = vor.u32 %v688, %v692
      %v695 = vshll.u32 %v646, 16
      %v697 = vrot.slane %v695, 1
      %v698 = vsel %vm393, %v693, %v697
      %v700 = vshrl.u32 %v607, 16
      %v702 = vshll.u32 %v607, 16
      %v704 = vrot.slane %v702, 1
      %v705 = vor.u32 %v700, %v704
      %v707 = vshll.u32 %v647, 16
      %v709 = vrot.slane %v707, 1
      %v710 = vsel %vm393, %v705, %v709
      %v712 = vshrl.u32 %v608, 16
      %v714 = vshll.u32 %v608, 16
      %v716 = vrot.slane %v714, 1
      %v717 = vor.u32 %v712, %v716
      %v719 = vshll.u32 %v648, 16
      %v721 = vrot.slane %v719, 1
      %v722 = vsel %vm393, %v717, %v721
      %v724 = vshrl.u32 %v609, 16
      %v726 = vshll.u32 %v609, 16
      %v728 = vrot.slane %v726, 1
      %v729 = vor.u32 %v724, %v728
      %v731 = vshll.u32 %v649, 16
      %v733 = vrot.slane %v731, 1
      %v734 = vsel %vm393, %v729, %v733
      %v736 = vshrl.u32 %v610, 16
      %v738 = vshll.u32 %v610, 16
      %v740 = vrot.slane %v738, 1
      %v741 = vor.u32 %v736, %v740
      %v743 = vshll.u32 %v650, 16
      %v745 = vrot.slane %v743, 1
      %v746 = vsel %vm393, %v741, %v745
      %747 = vrot.lane.b32.xlu0 %v662, 16
      %v748 = vpop.permute.xlu0 %747
      %749 = vrot.lane.b32.xlu0 %v674, 16
      %v750 = vpop.permute.xlu0 %749
      %751 = vrot.lane.b32.xlu0 %v686, 16
      %v752 = vpop.permute.xlu0 %751
      %753 = vrot.lane.b32.xlu0 %v698, 16
      %v754 = vpop.permute.xlu0 %753
      %755 = vrot.lane.b32.xlu0 %v710, 16
      %v756 = vpop.permute.xlu0 %755
      %757 = vrot.lane.b32.xlu0 %v722, 16
      %v758 = vpop.permute.xlu0 %757
      %759 = vrot.lane.b32.xlu0 %v734, 16
      %v760 = vpop.permute.xlu0 %759
      %761 = vrot.lane.b32.xlu0 %v746, 16
      %v762 = vpop.permute.xlu0 %761
      %v771 = vunpack.c.l.b16 %v285
      %v772 = vunpack.c.l.b16 %v286
      %v773 = vunpack.c.l.b16 %v287
      %v774 = vunpack.c.l.b16 %v288
      %v775 = vunpack.c.l.b16 %v289
      %v776 = vunpack.c.l.b16 %v290
      %v777 = vunpack.c.l.b16 %v291
      %v778 = vunpack.c.l.b16 %v292
      %v779 = vpack.c.b16 %v588, %v771
      %v780 = vpack.c.b16 %v590, %v772
      %v781 = vpack.c.b16 %v592, %v773
      %v782 = vpack.c.b16 %v594, %v774
      %v783 = vpack.c.b16 %v596, %v775
      %v784 = vpack.c.b16 %v598, %v776
      %v785 = vpack.c.b16 %v600, %v777
      %v786 = vpack.c.b16 %v602, %v778
      %v787 = vrot.slane %v779, 1
      %v788 = vrot.slane %v643, 1
      %v789 = vsel %vm530, %v787, %v788
      %v790 = vrot.slane %v780, 1
      %v791 = vrot.slane %v644, 1
      %v792 = vsel %vm530, %v790, %v791
      %v793 = vrot.slane %v781, 1
      %v794 = vrot.slane %v645, 1
      %v795 = vsel %vm530, %v793, %v794
      %v796 = vrot.slane %v782, 1
      %v797 = vrot.slane %v646, 1
      %v798 = vsel %vm530, %v796, %v797
      %v799 = vrot.slane %v783, 1
      %v800 = vrot.slane %v647, 1
      %v801 = vsel %vm530, %v799, %v800
      %v802 = vrot.slane %v784, 1
      %v803 = vrot.slane %v648, 1
      %v804 = vsel %vm530, %v802, %v803
      %v805 = vrot.slane %v785, 1
      %v806 = vrot.slane %v649, 1
      %v807 = vsel %vm530, %v805, %v806
      %v808 = vrot.slane %v786, 1
      %v809 = vrot.slane %v650, 1
      %v810 = vsel %vm530, %v808, %v809
      %811 = vrot.lane.b32.xlu0 %v789, 20
      %v812 = vpop.permute.xlu0 %811
      %813 = vrot.lane.b32.xlu0 %v792, 20
      %v814 = vpop.permute.xlu0 %813
      %815 = vrot.lane.b32.xlu0 %v795, 20
      %v816 = vpop.permute.xlu0 %815
      %817 = vrot.lane.b32.xlu0 %v798, 20
      %v818 = vpop.permute.xlu0 %817
      %819 = vrot.lane.b32.xlu0 %v801, 20
      %v820 = vpop.permute.xlu0 %819
      %821 = vrot.lane.b32.xlu0 %v804, 20
      %v822 = vpop.permute.xlu0 %821
      %823 = vrot.lane.b32.xlu0 %v807, 20
      %v824 = vpop.permute.xlu0 %823
      %825 = vrot.lane.b32.xlu0 %v810, 20
      %v826 = vpop.permute.xlu0 %825
      %v843 = vunpack.c.l.b16 %v297
      %v844 = vunpack.c.l.b16 %v298
      %v845 = vunpack.c.l.b16 %v299
      %v846 = vunpack.c.l.b16 %v300
      %v847 = vunpack.c.l.b16 %v301
      %v848 = vunpack.c.l.b16 %v302
      %v849 = vunpack.c.l.b16 %v303
      %v850 = vunpack.c.l.b16 %v304
      %v851 = vunpack.c.l.b16 %v305
      %v852 = vunpack.c.l.b16 %v306
      %v853 = vunpack.c.l.b16 %v307
      %v854 = vunpack.c.l.b16 %v308
      %v855 = vunpack.c.l.b16 %v309
      %v856 = vunpack.c.l.b16 %v310
      %v857 = vunpack.c.l.b16 %v311
      %v858 = vunpack.c.l.b16 %v312
      %v859 = vpack.c.b16 %v844, %v843
      %v860 = vpack.c.b16 %v846, %v845
      %v861 = vpack.c.b16 %v848, %v847
      %v862 = vpack.c.b16 %v850, %v849
      %v863 = vpack.c.b16 %v852, %v851
      %v864 = vpack.c.b16 %v854, %v853
      %v865 = vpack.c.b16 %v856, %v855
      %v866 = vpack.c.b16 %v858, %v857
      %867 = vrot.lane.b32.xlu0 %v859, 24
      %v868 = vpop.permute.xlu0 %867
      %869 = vrot.lane.b32.xlu0 %v860, 24
      %v870 = vpop.permute.xlu0 %869
      %871 = vrot.lane.b32.xlu0 %v861, 24
      %v872 = vpop.permute.xlu0 %871
      %873 = vrot.lane.b32.xlu0 %v862, 24
      %v874 = vpop.permute.xlu0 %873
      %875 = vrot.lane.b32.xlu0 %v863, 24
      %v876 = vpop.permute.xlu0 %875
      %877 = vrot.lane.b32.xlu0 %v864, 24
      %v878 = vpop.permute.xlu0 %877
      %879 = vrot.lane.b32.xlu0 %v865, 24
      %v880 = vpop.permute.xlu0 %879
      %881 = vrot.lane.b32.xlu0 %v866, 24
      %v882 = vpop.permute.xlu0 %881
      %v891 = vunpack.c.l.b16 %v313
      %v892 = vunpack.c.l.b16 %v314
      %v893 = vunpack.c.l.b16 %v315
      %v894 = vunpack.c.l.b16 %v316
      %v895 = vunpack.c.l.b16 %v317
      %v896 = vunpack.c.l.b16 %v318
      %v897 = vunpack.c.l.b16 %v319
      %v898 = vunpack.c.l.b16 %v320
      %v899 = vpack.c.b16 %v891, %v891
      %v900 = vpack.c.b16 %v892, %v892
      %v901 = vpack.c.b16 %v893, %v893
      %v902 = vpack.c.b16 %v894, %v894
      %v903 = vpack.c.b16 %v895, %v895
      %v904 = vpack.c.b16 %v896, %v896
      %v905 = vpack.c.b16 %v897, %v897
      %v906 = vpack.c.b16 %v898, %v898
      %v908 = vshrl.u32 %v859, 16
      %v910 = vshll.u32 %v859, 16
      %v912 = vrot.slane %v910, 1
      %v913 = vor.u32 %v908, %v912
      %v915 = vshll.u32 %v899, 16
      %v917 = vrot.slane %v915, 1
      %v918 = vsel %vm393, %v913, %v917
      %v920 = vshrl.u32 %v860, 16
      %v922 = vshll.u32 %v860, 16
      %v924 = vrot.slane %v922, 1
      %v925 = vor.u32 %v920, %v924
      %v927 = vshll.u32 %v900, 16
      %v929 = vrot.slane %v927, 1
      %v930 = vsel %vm393, %v925, %v929
      %v932 = vshrl.u32 %v861, 16
      %v934 = vshll.u32 %v861, 16
      %v936 = vrot.slane %v934, 1
      %v937 = vor.u32 %v932, %v936
      %v939 = vshll.u32 %v901, 16
      %v941 = vrot.slane %v939, 1
      %v942 = vsel %vm393, %v937, %v941
      %v944 = vshrl.u32 %v862, 16
      %v946 = vshll.u32 %v862, 16
      %v948 = vrot.slane %v946, 1
      %v949 = vor.u32 %v944, %v948
      %v951 = vshll.u32 %v902, 16
      %v953 = vrot.slane %v951, 1
      %v954 = vsel %vm393, %v949, %v953
      %v956 = vshrl.u32 %v863, 16
      %v958 = vshll.u32 %v863, 16
      %v960 = vrot.slane %v958, 1
      %v961 = vor.u32 %v956, %v960
      %v963 = vshll.u32 %v903, 16
      %v965 = vrot.slane %v963, 1
      %v966 = vsel %vm393, %v961, %v965
      %v968 = vshrl.u32 %v864, 16
      %v970 = vshll.u32 %v864, 16
      %v972 = vrot.slane %v970, 1
      %v973 = vor.u32 %v968, %v972
      %v975 = vshll.u32 %v904, 16
      %v977 = vrot.slane %v975, 1
      %v978 = vsel %vm393, %v973, %v977
      %v980 = vshrl.u32 %v865, 16
      %v982 = vshll.u32 %v865, 16
      %v984 = vrot.slane %v982, 1
      %v985 = vor.u32 %v980, %v984
      %v987 = vshll.u32 %v905, 16
      %v989 = vrot.slane %v987, 1
      %v990 = vsel %vm393, %v985, %v989
      %v992 = vshrl.u32 %v866, 16
      %v994 = vshll.u32 %v866, 16
      %v996 = vrot.slane %v994, 1
      %v997 = vor.u32 %v992, %v996
      %v999 = vshll.u32 %v906, 16
      %v1001 = vrot.slane %v999, 1
      %v1002 = vsel %vm393, %v997, %v1001
      %1003 = vrot.lane.b32.xlu0 %v918, 28
      %v1004 = vpop.permute.xlu0 %1003
      %1005 = vrot.lane.b32.xlu0 %v930, 28
      %v1006 = vpop.permute.xlu0 %1005
      %1007 = vrot.lane.b32.xlu0 %v942, 28
      %v1008 = vpop.permute.xlu0 %1007
      %1009 = vrot.lane.b32.xlu0 %v954, 28
      %v1010 = vpop.permute.xlu0 %1009
      %1011 = vrot.lane.b32.xlu0 %v966, 28
      %v1012 = vpop.permute.xlu0 %1011
      %1013 = vrot.lane.b32.xlu0 %v978, 28
      %v1014 = vpop.permute.xlu0 %1013
      %1015 = vrot.lane.b32.xlu0 %v990, 28
      %v1016 = vpop.permute.xlu0 %1015
      %1017 = vrot.lane.b32.xlu0 %v1002, 28
      %v1018 = vpop.permute.xlu0 %1017
      %v1027 = vunpack.c.l.b16 %v321
      %v1028 = vunpack.c.l.b16 %v322
      %v1029 = vunpack.c.l.b16 %v323
      %v1030 = vunpack.c.l.b16 %v324
      %v1031 = vunpack.c.l.b16 %v325
      %v1032 = vunpack.c.l.b16 %v326
      %v1033 = vunpack.c.l.b16 %v327
      %v1034 = vunpack.c.l.b16 %v328
      %v1035 = vpack.c.b16 %v844, %v1027
      %v1036 = vpack.c.b16 %v846, %v1028
      %v1037 = vpack.c.b16 %v848, %v1029
      %v1038 = vpack.c.b16 %v850, %v1030
      %v1039 = vpack.c.b16 %v852, %v1031
      %v1040 = vpack.c.b16 %v854, %v1032
      %v1041 = vpack.c.b16 %v856, %v1033
      %v1042 = vpack.c.b16 %v858, %v1034
      %v1043 = vrot.slane %v1035, 1
      %v1044 = vrot.slane %v899, 1
      %v1045 = vsel %vm530, %v1043, %v1044
      %v1046 = vrot.slane %v1036, 1
      %v1047 = vrot.slane %v900, 1
      %v1048 = vsel %vm530, %v1046, %v1047
      %v1049 = vrot.slane %v1037, 1
      %v1050 = vrot.slane %v901, 1
      %v1051 = vsel %vm530, %v1049, %v1050
      %v1052 = vrot.slane %v1038, 1
      %v1053 = vrot.slane %v902, 1
      %v1054 = vsel %vm530, %v1052, %v1053
      %v1055 = vrot.slane %v1039, 1
      %v1056 = vrot.slane %v903, 1
      %v1057 = vsel %vm530, %v1055, %v1056
      %v1058 = vrot.slane %v1040, 1
      %v1059 = vrot.slane %v904, 1
      %v1060 = vsel %vm530, %v1058, %v1059
      %v1061 = vrot.slane %v1041, 1
      %v1062 = vrot.slane %v905, 1
      %v1063 = vsel %vm530, %v1061, %v1062
      %v1064 = vrot.slane %v1042, 1
      %v1065 = vrot.slane %v906, 1
      %v1066 = vsel %vm530, %v1064, %v1065
      %1067 = vrot.lane.b32.xlu0 %v1045, 32
      %v1068 = vpop.permute.xlu0 %1067
      %1069 = vrot.lane.b32.xlu0 %v1048, 32
      %v1070 = vpop.permute.xlu0 %1069
      %1071 = vrot.lane.b32.xlu0 %v1051, 32
      %v1072 = vpop.permute.xlu0 %1071
      %1073 = vrot.lane.b32.xlu0 %v1054, 32
      %v1074 = vpop.permute.xlu0 %1073
      %1075 = vrot.lane.b32.xlu0 %v1057, 32
      %v1076 = vpop.permute.xlu0 %1075
      %1077 = vrot.lane.b32.xlu0 %v1060, 32
      %v1078 = vpop.permute.xlu0 %1077
      %1079 = vrot.lane.b32.xlu0 %v1063, 32
      %v1080 = vpop.permute.xlu0 %1079
      %1081 = vrot.lane.b32.xlu0 %v1066, 32
      %v1082 = vpop.permute.xlu0 %1081
      %vm1083 = vcmask 31744
      %v1085 = vsel %vm1083, %v361, %v491
      %v1087 = vsel %vm1083, %v362, %v493
      %v1089 = vsel %vm1083, %v363, %v495
      %v1091 = vsel %vm1083, %v364, %v497
      %v1093 = vsel %vm1083, %v365, %v499
      %v1095 = vsel %vm1083, %v366, %v501
      %v1097 = vsel %vm1083, %v367, %v503
      %v1099 = vsel %vm1083, %v368, %v505
      %vm1100 = vcmask 64512
      %v1102 = vsel %vm1100, %v1085, %v556
      %v1104 = vsel %vm1100, %v1087, %v558
      %v1106 = vsel %vm1100, %v1089, %v560
      %v1108 = vsel %vm1100, %v1091, %v562
      %v1110 = vsel %vm1100, %v1093, %v564
      %v1112 = vsel %vm1100, %v1095, %v566
      %v1114 = vsel %vm1100, %v1097, %v568
      %v1116 = vsel %vm1100, %v1099, %v570
      %vm1117 = vcmask 97280
      %v1119 = vsel %vm1117, %v1102, %v612
      %v1121 = vsel %vm1117, %v1104, %v614
      %v1123 = vsel %vm1117, %v1106, %v616
      %v1125 = vsel %vm1117, %v1108, %v618
      %v1127 = vsel %vm1117, %v1110, %v620
      %v1129 = vsel %vm1117, %v1112, %v622
      %v1131 = vsel %vm1117, %v1114, %v624
      %v1133 = vsel %vm1117, %v1116, %v626
      %vm1134 = vcmask 130048
      %v1136 = vsel %vm1134, %v1119, %v748
      %v1138 = vsel %vm1134, %v1121, %v750
      %v1140 = vsel %vm1134, %v1123, %v752
      %v1142 = vsel %vm1134, %v1125, %v754
      %v1144 = vsel %vm1134, %v1127, %v756
      %v1146 = vsel %vm1134, %v1129, %v758
      %v1148 = vsel %vm1134, %v1131, %v760
      %v1150 = vsel %vm1134, %v1133, %v762
      %vm1151 = vcmask 162816
      %v1153 = vsel %vm1151, %v1136, %v812
      %v1155 = vsel %vm1151, %v1138, %v814
      %v1157 = vsel %vm1151, %v1140, %v816
      %v1159 = vsel %vm1151, %v1142, %v818
      %v1161 = vsel %vm1151, %v1144, %v820
      %v1163 = vsel %vm1151, %v1146, %v822
      %v1165 = vsel %vm1151, %v1148, %v824
      %v1167 = vsel %vm1151, %v1150, %v826
      %vm1168 = vcmask 195584
      %v1170 = vsel %vm1168, %v1153, %v868
      %v1172 = vsel %vm1168, %v1155, %v870
      %v1174 = vsel %vm1168, %v1157, %v872
      %v1176 = vsel %vm1168, %v1159, %v874
      %v1178 = vsel %vm1168, %v1161, %v876
      %v1180 = vsel %vm1168, %v1163, %v878
      %v1182 = vsel %vm1168, %v1165, %v880
      %v1184 = vsel %vm1168, %v1167, %v882
      %vm1185 = vcmask 228352
      %v1187 = vsel %vm1185, %v1170, %v1004
      %v1189 = vsel %vm1185, %v1172, %v1006
      %v1191 = vsel %vm1185, %v1174, %v1008
      %v1193 = vsel %vm1185, %v1176, %v1010
      %v1195 = vsel %vm1185, %v1178, %v1012
      %v1197 = vsel %vm1185, %v1180, %v1014
      %v1199 = vsel %vm1185, %v1182, %v1016
      %v1201 = vsel %vm1185, %v1184, %v1018
      %vm1202 = vcmask 261120
      %v1204 = vsel %vm1202, %v1187, %v1068
      %v1206 = vsel %vm1202, %v1189, %v1070
      %v1208 = vsel %vm1202, %v1191, %v1072
      %v1210 = vsel %vm1202, %v1193, %v1074
      %v1212 = vsel %vm1202, %v1195, %v1076
      %v1214 = vsel %vm1202, %v1197, %v1078
      %v1216 = vsel %vm1202, %v1199, %v1080
      %v1218 = vsel %vm1202, %v1201, %v1082
      %v1219 = vld [vmem:[%s1] sm:$0xf]
      %v1220 = vld [vmem:[%s1 + $0x4] sm:$0xf]
      %v1221 = vld [vmem:[%s1 + $0x8] sm:$0xf]
      %v1222 = vld [vmem:[%s1 + $0xc] sm:$0xf]
      %v1223 = vld [vmem:[%s1 + $0x10] sm:$0x3]
      %v1229 = vunpack.c.l.b16 %v1219
      %v1230 = vunpack.c.l.b16 %v1220
      %v1231 = vunpack.c.l.b16 %v1221
      %v1232 = vunpack.c.l.b16 %v1222
      %v1233 = vunpack.c.l.b16 %v1223
      %v1234 = vpack.c.b16 %v1230, %v1229
      %v1235 = vpack.c.b16 %v1232, %v1231
      %v1236 = vpack.c.b16 %v1233, %v1233
      %vm1239 = vcmask 293888
      %v1240 = vsel %vm1239, %v1204, 0
      %v1242 = vsel %vm1239, %v1206, 0
      %v1244 = vsel %vm1239, %v1208, 0
      %v1246 = vsel %vm1239, %v1210, 0
      %v1248 = vsel %vm1239, %v1212, 0
      %v1250 = vsel %vm1239, %v1214, 0
      %v1252 = vsel %vm1239, %v1216, 0
      %v1254 = vsel %vm1239, %v1218, 0
      %vm1256 = vcmask 1041408
      %v1258 = vsel %vm1256, %v1236, 0
      %1260 = vmatprep.subr.bf16.mxu0 0
      %1261 = vmatpush1.bf16.msra.mxu0 %v1234
      %1262 = vmatprep.subr.bf16.mxu0 0
      %1263 = vmatpush1.bf16.msra.mxu0 %v1235
      %1264 = vmatprep.subr.bf16.mxu0 0
      %1265 = vmatpush1.bf16.msra.mxu0 %v1258
      %1266 = vmatprep.subr.bf16.mxu0 0
      %1267 = vmatpush1.bf16.msra.mxu0 0
      %1268 = vmatprep.subr.bf16.mxu0 0
      %1269 = vmatpush1.bf16.msra.mxu0 0
      %1270 = vmatprep.subr.bf16.mxu0 0
      %1271 = vmatpush1.bf16.msra.mxu0 0
      %1272 = vmatprep.subr.bf16.mxu0 0
      %1273 = vmatpush1.bf16.msra.mxu0 0
      %1274 = vmatprep.subr.bf16.mxu0 0
      %1275 = vmatpush1.bf16.msra.mxu0 0
      %1276 = vmatprep.subr.bf16.mxu0 0
      %1277 = vmatpush1.bf16.msra.mxu0 0
      %1278 = vmatprep.subr.bf16.mxu0 0
      %1279 = vmatpush1.bf16.msra.mxu0 0
      %1280 = vmatprep.subr.bf16.mxu0 0
      %1281 = vmatpush1.bf16.msra.mxu0 0
      %1282 = vmatprep.subr.bf16.mxu0 0
      %1283 = vmatpush1.bf16.msra.mxu0 0
      %1284 = vmatprep.subr.bf16.mxu0 0
      %1285 = vmatpush1.bf16.msra.mxu0 0
      %1286 = vmatprep.subr.bf16.mxu0 0
      %1287 = vmatpush1.bf16.msra.mxu0 0
      %1288 = vmatprep.subr.bf16.mxu0 0
      %1289 = vmatpush1.bf16.msra.mxu0 0
      %1290 = vmatprep.subr.bf16.mxu0 0
      %1291 = vmatpush1.bf16.msra.mxu0 0
      %1292 = vmatprep.mubr.bf16.mxu0 0
      %1293 = vmatmul.mubr.bf16.gmra.mrb[0].mxu0 %v1240
      %v1294 = vpop.f32.mrb[0].mxu0
      %v1295 = vadd.f32 0.0, %v1294
      %v1296 = vpop.f32.mrb[0].mxu0
      %v1297 = vpop.f32.mrb[0].mxu0
      %v1298 = vadd.f32 0.0, %v1297
      %v1299 = vpop.f32.mrb[0].mxu0
      %1300 = vmatprep.mubr.bf16.mxu0 0
      %1301 = vmatmul.mubr.bf16.gmra.mrb[0].mxu0 %v1242
      %v1302 = vpop.f32.mrb[0].mxu0
      %v1303 = vadd.f32 0.0, %v1302
      %v1304 = vpop.f32.mrb[0].mxu0
      %v1305 = vpop.f32.mrb[0].mxu0
      %v1306 = vadd.f32 0.0, %v1305
      %v1307 = vpop.f32.mrb[0].mxu0
      %1308 = vmatprep.mubr.bf16.mxu0 0
      %1309 = vmatmul.mubr.bf16.gmra.mrb[0].mxu0 %v1244
      %v1310 = vpop.f32.mrb[0].mxu0
      %v1311 = vadd.f32 0.0, %v1310
      %v1312 = vpop.f32.mrb[0].mxu0
      %v1313 = vpop.f32.mrb[0].mxu0
      %v1314 = vadd.f32 0.0, %v1313
      %v1315 = vpop.f32.mrb[0].mxu0
      %1316 = vmatprep.mubr.bf16.mxu0 0
      %1317 = vmatmul.mubr.bf16.gmra.mrb[0].mxu0 %v1246
      %v1318 = vpop.f32.mrb[0].mxu0
      %v1319 = vadd.f32 0.0, %v1318
      %v1320 = vpop.f32.mrb[0].mxu0
      %v1321 = vpop.f32.mrb[0].mxu0
      %v1322 = vadd.f32 0.0, %v1321
      %v1323 = vpop.f32.mrb[0].mxu0
      %1324 = vmatprep.mubr.bf16.mxu0 0
      %1325 = vmatmul.mubr.bf16.gmra.mrb[0].mxu0 %v1248
      %v1326 = vpop.f32.mrb[0].mxu0
      %v1327 = vadd.f32 0.0, %v1326
      %v1328 = vpop.f32.mrb[0].mxu0
      %v1329 = vpop.f32.mrb[0].mxu0
      %v1330 = vadd.f32 0.0, %v1329
      %v1331 = vpop.f32.mrb[0].mxu0
      %1332 = vmatprep.mubr.bf16.mxu0 0
      %1333 = vmatmul.mubr.bf16.gmra.mrb[0].mxu0 %v1250
      %v1334 = vpop.f32.mrb[0].mxu0
      %v1335 = vadd.f32 0.0, %v1334
      %v1336 = vpop.f32.mrb[0].mxu0
      %v1337 = vpop.f32.mrb[0].mxu0
      %v1338 = vadd.f32 0.0, %v1337
      %v1339 = vpop.f32.mrb[0].mxu0
      %1340 = vmatprep.mubr.bf16.mxu0 0
      %1341 = vmatmul.mubr.bf16.gmra.mrb[0].mxu0 %v1252
      %v1342 = vpop.f32.mrb[0].mxu0
      %v1343 = vadd.f32 0.0, %v1342
      %v1344 = vpop.f32.mrb[0].mxu0
      %v1345 = vpop.f32.mrb[0].mxu0
      %v1346 = vadd.f32 0.0, %v1345
      %v1347 = vpop.f32.mrb[0].mxu0
      %1348 = vmatprep.mubr.bf16.mxu0 0
      %1349 = vmatmul.mubr.bf16.gmra.mrb[0].mxu0 %v1254
      %v1350 = vpop.f32.mrb[0].mxu0
      %v1351 = vadd.f32 0.0, %v1350
      %v1352 = vpop.f32.mrb[0].mxu0
      %v1353 = vpop.f32.mrb[0].mxu0
      %v1354 = vadd.f32 0.0, %v1353
      %v1355 = vpop.f32.mrb[0].mxu0
      %1356 = vdwg.mxu0
      %v1357 = vld [vmem:[%s2] sm:$0x1]
      %v1359 = vlaneseq
      %v1360 = vshrl.u32 %v1359, 7
      %v1361 = vsub.s32 0, %v1360
      %v1362 = vrot.slane %v1357, %v1361
      %v1364 = vmul.f32 %v1295, %v1362
      %v1365 = vmul.f32 %v1298, %v1362
      %v1366 = vmul.f32 %v1303, %v1362
      %v1367 = vmul.f32 %v1306, %v1362
      %v1368 = vmul.f32 %v1311, %v1362
      %v1369 = vmul.f32 %v1314, %v1362
      %v1370 = vmul.f32 %v1319, %v1362
      %v1371 = vmul.f32 %v1322, %v1362
      %v1372 = vmul.f32 %v1327, %v1362
      %v1373 = vmul.f32 %v1330, %v1362
      %v1374 = vmul.f32 %v1335, %v1362
      %v1375 = vmul.f32 %v1338, %v1362
      %v1376 = vmul.f32 %v1343, %v1362
      %v1377 = vmul.f32 %v1346, %v1362
      %v1378 = vmul.f32 %v1351, %v1362
      %v1379 = vmul.f32 %v1354, %v1362
      %v1380 = vld [vmem:[%s3] sm:$0x1]
      %v1382 = vlaneseq
      %v1383 = vshrl.u32 %v1382, 7
      %v1384 = vsub.s32 0, %v1383
      %v1385 = vrot.slane %v1380, %v1384
      %v1387 = vadd.f32 %v1364, %v1385
      %v1388 = vadd.f32 %v1365, %v1385
      %v1389 = vadd.f32 %v1366, %v1385
      %v1390 = vadd.f32 %v1367, %v1385
      %v1391 = vadd.f32 %v1368, %v1385
      %v1392 = vadd.f32 %v1369, %v1385
      %v1393 = vadd.f32 %v1370, %v1385
      %v1394 = vadd.f32 %v1371, %v1385
      %v1395 = vadd.f32 %v1372, %v1385
      %v1396 = vadd.f32 %v1373, %v1385
      %v1397 = vadd.f32 %v1374, %v1385
      %v1398 = vadd.f32 %v1375, %v1385
      %v1399 = vadd.f32 %v1376, %v1385
      %v1400 = vadd.f32 %v1377, %v1385
      %v1401 = vadd.f32 %v1378, %v1385
      %v1402 = vadd.f32 %v1379, %v1385
      %v1403 = vmax.f32 %v1387, 0.0
      %v1404 = vmax.f32 %v1388, 0.0
      %v1405 = vmax.f32 %v1389, 0.0
      %v1406 = vmax.f32 %v1390, 0.0
      %v1407 = vmax.f32 %v1391, 0.0
      %v1408 = vmax.f32 %v1392, 0.0
      %v1409 = vmax.f32 %v1393, 0.0
      %v1410 = vmax.f32 %v1394, 0.0
      %v1411 = vmax.f32 %v1395, 0.0
      %v1412 = vmax.f32 %v1396, 0.0
      %v1413 = vmax.f32 %v1397, 0.0
      %v1414 = vmax.f32 %v1398, 0.0
      %v1415 = vmax.f32 %v1399, 0.0
      %v1416 = vmax.f32 %v1400, 0.0
      %v1417 = vmax.f32 %v1401, 0.0
      %v1418 = vmax.f32 %v1402, 0.0
      %v1419 = vpack.c.bf16 %v1404, %v1403
      %v1420 = vpack.c.bf16 %v1406, %v1405
      %v1421 = vpack.c.bf16 %v1408, %v1407
      %v1422 = vpack.c.bf16 %v1410, %v1409
      %v1423 = vpack.c.bf16 %v1412, %v1411
      %v1424 = vpack.c.bf16 %v1414, %v1413
      %v1425 = vpack.c.bf16 %v1416, %v1415
      %v1426 = vpack.c.bf16 %v1418, %v1417
      %v1435 = vunpack.c.l.b16 %v1419
      %v1436 = vunpack.c.h.b16 %v1419
      %v1437 = vunpack.c.l.b16 %v1420
      %v1438 = vunpack.c.h.b16 %v1420
      %v1439 = vunpack.c.l.b16 %v1421
      %v1440 = vunpack.c.h.b16 %v1421
      %v1441 = vunpack.c.l.b16 %v1422
      %v1442 = vunpack.c.h.b16 %v1422
      %v1443 = vunpack.c.l.b16 %v1423
      %v1444 = vunpack.c.h.b16 %v1423
      %v1445 = vunpack.c.l.b16 %v1424
      %v1446 = vunpack.c.h.b16 %v1424
      %v1447 = vunpack.c.l.b16 %v1425
      %v1448 = vunpack.c.h.b16 %v1425
      %v1449 = vunpack.c.l.b16 %v1426
      %v1450 = vunpack.c.h.b16 %v1426
      %v1451 = vpack.c.b16 %v1435, %v1435
      %v1452 = vpack.c.b16 %v1436, %v1436
      %v1453 = vpack.c.b16 %v1437, %v1437
      %v1454 = vpack.c.b16 %v1438, %v1438
      %v1455 = vpack.c.b16 %v1439, %v1439
      %v1456 = vpack.c.b16 %v1440, %v1440
      %v1457 = vpack.c.b16 %v1441, %v1441
      %v1458 = vpack.c.b16 %v1442, %v1442
      %v1459 = vpack.c.b16 %v1443, %v1443
      %v1460 = vpack.c.b16 %v1444, %v1444
      %v1461 = vpack.c.b16 %v1445, %v1445
      %v1462 = vpack.c.b16 %v1446, %v1446
      %v1463 = vpack.c.b16 %v1447, %v1447
      %v1464 = vpack.c.b16 %v1448, %v1448
      %v1465 = vpack.c.b16 %v1449, %v1449
      %v1466 = vpack.c.b16 %v1450, %v1450
      %vm1483 = vcmask 60416
      %1484 = vst.msk [vmem:[%s219] sm:$0xf] %vm1483, %v1451
      %1485 = vst.msk [vmem:[%s219 + $0x4] sm:$0xf] %vm1483, %v1452
      %1486 = vst.msk [vmem:[%s219 + $0x8] sm:$0xf] %vm1483, %v1453
      %1487 = vst.msk [vmem:[%s219 + $0xc] sm:$0xf] %vm1483, %v1454
      %1488 = vst.msk [vmem:[%s219 + $0x10] sm:$0xf] %vm1483, %v1455
      %1489 = vst.msk [vmem:[%s219 + $0x14] sm:$0xf] %vm1483, %v1456
      %1490 = vst.msk [vmem:[%s219 + $0x18] sm:$0xf] %vm1483, %v1457
      %1491 = vst.msk [vmem:[%s219 + $0x1c] sm:$0xf] %vm1483, %v1458
      %1492 = vst.msk [vmem:[%s219 + $0x20] sm:$0xf] %vm1483, %v1459
      %1493 = vst.msk [vmem:[%s219 + $0x24] sm:$0xf] %vm1483, %v1460
      %1494 = vst.msk [vmem:[%s219 + $0x28] sm:$0xf] %vm1483, %v1461
      %1495 = vst.msk [vmem:[%s219 + $0x2c] sm:$0xf] %vm1483, %v1462
      %1496 = vst.msk [vmem:[%s219 + $0x30] sm:$0xf] %vm1483, %v1463
      %1497 = vst.msk [vmem:[%s219 + $0x34] sm:$0xf] %vm1483, %v1464
      %1498 = vst.msk [vmem:[%s219 + $0x38] sm:$0xf] %vm1483, %v1465
      %1499 = vst.msk [vmem:[%s219 + $0x3c] sm:$0xf] %vm1483, %v1466
      %p1500 = scmp.lt.s32.totalorder %s19, 1
      %s1501 = scalar_select %p1500, %s19, 1
      %p1502 = scmp.lt.s32.totalorder %s20, 1
      %s1503 = scalar_select %p1502, %s20, 1
      %s1504 = smul.addr %s1503, 16
      %s1505 = smul.addr %s1501, 32
      %s1506 = sadd.s32 %s1504, %s1505
      %s1507 = smul.addr %s1506, 4
      %s1508 = scalar_lea.vmem %s4, %s1507
      // Predicated region
      $region37: #{basic_conv2d_forward.1} parent=35 // pred_check
        %p1509 = pneg %p136
      $region38: #{basic_conv2d_forward.1} parent=35 // pred_check_branch
        %1511 = sbr.rel (%p1509) target = $region40
      $region39: #{basic_conv2d_forward.1} parent=35 // pred_region
        _
      $region40: #{basic_conv2d_forward.1} parent=35 // pred_fallthru
        _
    $region36: #{basic_conv2d_forward.1} parent=5 // pred_fallthru
      _
    %p1512 = scmp.le.s32.totalorder 2, %s10
    // Predicated region
    $region41: #{basic_conv2d_forward.1} parent=5 // pred_check
      %p1513 = pneg %p1512
    $region42: #{basic_conv2d_forward.1} parent=5 // pred_check_branch
      %1515 = sbr.rel (%p1513) target = $region44
    $region43: #{basic_conv2d_forward.1} parent=5 // pred_region
      %s1516 = ssub.s32 %s10, 2
      // Predicated region
      $region45: #{basic_conv2d_forward.1} parent=43 // pred_check
        %p1517 = pneg %p142
      $region46: #{basic_conv2d_forward.1} parent=43 // pred_check_branch
        %1519 = sbr.rel (%p1517) target = $region48
      $region47: #{basic_conv2d_forward.1} parent=43 // pred_region
        %p1520 = scmp.lt.s32.totalorder %s21, 1
        %s1521 = scalar_select %p1520, %s21, 1
        %p1522 = scmp.lt.s32.totalorder %s22, 1
        %s1523 = scalar_select %p1522, %s22, 1
        %s1524 = smul.addr %s1523, 16
        %s1525 = smul.addr %s1521, 32
        %s1526 = sadd.s32 %s1524, %s1525
        %s1527 = smul.addr %s1526, 4
        %s1528 = scalar_lea.vmem %s4, %s1527
      $region48: #{basic_conv2d_forward.1} parent=43 // pred_fallthru
        _
    $region44: #{basic_conv2d_forward.1} parent=5 // pred_fallthru
      _
  $region6: #{basic_conv2d_forward.1} parent=0 // loop_footer
    %s14 = sadd.s32 1, %s10
  $region7: #{basic_conv2d_forward.1} parent=0 // loop_footer_branch
    %9 = sbr.rel target = $region3
  $region8: #{basic_conv2d_forward.1} parent=0 // loop_exit
    _

</llo_original>
